<compile_context>
chip_gen: v6e
topology: v6e:2x2x1
jax: 0.10.0
libtpu: 0.0.40
codegen_flags: <defaults>
</compile_context>

<pallas_src>
from functools import partial

import jax
import jax.numpy as jnp
from jax import lax
from jax.experimental import pallas as pl
from jax.experimental.pallas import tpu as pltpu


def _layernorm(x, gamma, beta, h_real, eps=1e-5):
    """LayerNorm over the last dim using only the first h_real (real) features.

    Padded columns of x are guaranteed zero by construction; gamma/beta are
    zero-padded, so padded output columns come out exactly zero as well.
    """
    hp = x.shape[-1]
    if h_real == hp:
        mean = jnp.mean(x, axis=-1, keepdims=True)
        d = x - mean
    else:
        inv_h = jnp.float32(1.0 / h_real)
        mean = jnp.sum(x, axis=-1, keepdims=True) * inv_h
        col = lax.broadcasted_iota(jnp.int32, x.shape, 1)
        d = jnp.where(col < h_real, x - mean, 0.0)
    var = jnp.sum(d * d, axis=-1, keepdims=True) * jnp.float32(1.0 / h_real)
    return d * lax.rsqrt(var + eps) * gamma + beta


def gcl_kernel(topk, n_real, h_real, mxu_dtype,
               nv1_ref, tgt_ref, nv2_ref, src_ref,
               w1t_ref, b1_ref, w2t_ref, b2_ref,
               g1_ref, be1_ref, g2_ref, be2_ref,
               out_ref):
    f32 = jnp.float32
    neg_inf = f32(-jnp.inf)

    nv1 = nv1_ref[...]                              # [tm, Hp] (row tile)
    nv2 = nv2_ref[...]                              # [Np, Hp] (resident)

    # ---- adjacency row-tile: contract the H axes directly (no in-kernel .T) ------
    adj = lax.dot_general(nv1.astype(mxu_dtype), nv2.astype(mxu_dtype),
                          (((1,), (1,)), ((), ())),
                          preferred_element_type=f32)          # [tm, Np]

    # mask padded (fake) node columns out of the top-k / softmax
    if n_real != adj.shape[-1]:
        col = lax.broadcasted_iota(jnp.int32, adj.shape, 1)
        adj = jnp.where(col < n_real, adj, neg_inf)

    # ---- per-row k-th-largest threshold (topk static -> unrolled) ----------------
    # Only `adj` and `cur` are live [tm, Np] buffers.
    cur = adj
    for _ in range(topk - 1):
        m = jnp.max(cur, axis=-1, keepdims=True)
        cur = jnp.where(cur >= m, neg_inf, cur)
    thresh = jnp.max(cur, axis=-1, keepdims=True)              # k-th largest / row

    # ---- masked softmax with normalisation folded through the matmul -------------
    row_max = jnp.max(adj, axis=-1, keepdims=True)
    e = jnp.where(adj >= thresh, jnp.exp(adj - row_max), 0.0)  # un-normalised probs
    z = jnp.sum(e, axis=-1, keepdims=True)                     # [tm, 1]
    gconv = jnp.dot(e.astype(mxu_dtype), src_ref[...].astype(mxu_dtype),
                    preferred_element_type=f32)                # [tm, Hp]
    gconv = gconv * pl.reciprocal(z, approx=False)             # O(tm) recip, no N^2 divide

    # ---- residual + LayerNorm 1 ---------------------------------------------------
    t1 = _layernorm(tgt_ref[...] + gconv, g1_ref[...], be1_ref[...], h_real)

    # ---- feed forward (dropout == identity in eval mode); weights pre-transposed --
    h = jnp.maximum(
        jnp.dot(t1.astype(mxu_dtype), w1t_ref[...].astype(mxu_dtype),
                preferred_element_type=f32) + b1_ref[...], 0.0)
    f = jnp.dot(h.astype(mxu_dtype), w2t_ref[...].astype(mxu_dtype),
                preferred_element_type=f32) + b2_ref[...]

    # ---- residual + LayerNorm 2 ---------------------------------------------------
    out_ref[...] = _layernorm(t1 + f, g2_ref[...], be2_ref[...], h_real)


def _round_up(x, m):
    return ((x + m - 1) // m) * m


def graph_convolution_layer(src, tgt, nv1, nv2, w1, b1, w2, b2,
                            g1, be1, g2, be2, *, topk,
                            row_tile=256, mxu_dtype=jnp.float32,
                            vmem_limit_bytes=None):
    N, H = src.shape
    assert 1 <= topk <= N, "topk must be in [1, num_nodes]"

    Hp = _round_up(H, 128)                       # lane-dense feature dim
    tm = min(row_tile, _round_up(N, 8))          # sublane-aligned row tile
    Np = _round_up(N, tm)                        # rows padded to a whole # of tiles

    def pad2(x):
        return jnp.pad(x, ((0, Np - x.shape[0]), (0, Hp - x.shape[1])))

    def pad_row(v):                              # 1-D param -> (1, Hp), zero-padded
        return jnp.pad(v, (0, Hp - v.shape[0])).reshape(1, Hp)

    srcP, tgtP, nv1P, nv2P = pad2(src), pad2(tgt), pad2(nv1), pad2(nv2)
    w1tP = jnp.pad(w1.T, ((0, Hp - H), (0, Hp - H)))   # transpose ONCE, outside kernel
    w2tP = jnp.pad(w2.T, ((0, Hp - H), (0, Hp - H)))
    b1P, b2P = pad_row(b1), pad_row(b2)
    g1P, be1P = pad_row(g1), pad_row(be1)
    g2P, be2P = pad_row(g2), pad_row(be2)

    row_spec = pl.BlockSpec((tm, Hp), lambda i: (i, 0))          # tiled over rows

    def resident(shape):                                         # whole-array, reused
        return pl.BlockSpec(shape, lambda i: (0,) * len(shape))

    cp_kwargs = dict(dimension_semantics=("parallel",))          # shards across TCs on v7x
    if vmem_limit_bytes is not None:
        cp_kwargs["vmem_limit_bytes"] = vmem_limit_bytes         # raise for large N

    outP = pl.pallas_call(
        partial(gcl_kernel, topk, N, H, mxu_dtype),
        out_shape=jax.ShapeDtypeStruct((Np, Hp), jnp.float32),
        grid=(Np // tm,),
        in_specs=[row_spec,                    # nodevec1  (row tile)
                  row_spec,                    # tgt       (row tile)
                  resident((Np, Hp)),          # nodevec2  (resident)
                  resident((Np, Hp)),          # src       (resident)
                  resident((Hp, Hp)),          # w1.T
                  resident((1, Hp)),           # b1
                  resident((Hp, Hp)),          # w2.T
                  resident((1, Hp)),           # b2
                  resident((1, Hp)),           # gamma1
                  resident((1, Hp)),           # beta1
                  resident((1, Hp)),           # gamma2
                  resident((1, Hp))],          # beta2
        out_specs=row_spec,
        compiler_params=pltpu.CompilerParams(**cp_kwargs),
    )(nv1P, tgtP, nv2P, srcP, w1tP, b1P, w2tP, b2P, g1P, be1P, g2P, be2P)

    return outP[:N, :H]


def ref_forward(src, tgt, nv1, nv2, w1, b1, w2, b2, g1, be1, g2, be2, topk):
    """Pure-JAX reference mirroring the PyTorch module (eval mode)."""
    adj = nv1 @ nv2.T
    kth = jax.lax.top_k(adj, topk)[0][:, -1:]
    sparse = jnp.where(adj >= kth, adj, -jnp.inf)
    p = jax.nn.softmax(sparse, axis=-1)
    gconv = p @ src

    def ln(x, g, b):
        m = jnp.mean(x, -1, keepdims=True)
        v = jnp.mean((x - m) ** 2, -1, keepdims=True)
        return (x - m) / jnp.sqrt(v + 1e-5) * g + b

    t1 = ln(tgt + gconv, g1, be1)
    h = jnp.maximum(t1 @ w1.T + b1, 0.0)
    f = h @ w2.T + b2
    return ln(t1 + f, g2, be2)


if __name__ == "__main__":
    N, H, TOPK = 8, 32, 4          # num_nodes, hidden_dim, topk

    key = jax.random.PRNGKey(0)
    ks = jax.random.split(key, 8)
    src = jax.random.normal(ks[0], (N, H), jnp.float32)
    tgt = jax.random.normal(ks[1], (N, H), jnp.float32)

    # parameters (deterministic synthetic init; shapes per module __init__)
    nv1 = jax.random.uniform(ks[2], (N, H), jnp.float32)           # torch.rand
    nv2 = jax.random.uniform(ks[3], (N, H), jnp.float32)
    bound = 1.0 / (H ** 0.5)
    w1 = jax.random.uniform(ks[4], (H, H), jnp.float32, -bound, bound)
    b1 = jax.random.uniform(ks[5], (H,), jnp.float32, -bound, bound)
    w2 = jax.random.uniform(ks[6], (H, H), jnp.float32, -bound, bound)
    b2 = jax.random.uniform(ks[7], (H,), jnp.float32, -bound, bound)
    g1 = jnp.ones((H,), jnp.float32)
    be1 = jnp.zeros((H,), jnp.float32)
    g2 = jnp.ones((H,), jnp.float32)
    be2 = jnp.zeros((H,), jnp.float32)

    out = graph_convolution_layer(src, tgt, nv1, nv2, w1, b1, w2, b2,
                                  g1, be1, g2, be2, topk=TOPK)
    out = jax.block_until_ready(out)

    ref = ref_forward(src, tgt, nv1, nv2, w1, b1, w2, b2,
                      g1, be1, g2, be2, TOPK)
    assert out.shape == (N, H) and out.dtype == jnp.float32
    assert jnp.allclose(out, ref, atol=1e-4, rtol=1e-4), "mismatch vs reference"

    print("KERNEL_OK")
</pallas_src>

<mosaic_0001>
module attributes {stable_mosaic.version = 11 : i64} {
  func.func @gcl_kernel(%arg0: i32, %arg1: memref<8x128xf32, #tpu.memory_space<vmem>>, %arg2: memref<8x128xf32, #tpu.memory_space<vmem>>, %arg3: memref<8x128xf32, #tpu.memory_space<vmem>>, %arg4: memref<8x128xf32, #tpu.memory_space<vmem>>, %arg5: memref<128x128xf32, #tpu.memory_space<vmem>>, %arg6: memref<1x128xf32, #tpu.memory_space<vmem>>, %arg7: memref<128x128xf32, #tpu.memory_space<vmem>>, %arg8: memref<1x128xf32, #tpu.memory_space<vmem>>, %arg9: memref<1x128xf32, #tpu.memory_space<vmem>>, %arg10: memref<1x128xf32, #tpu.memory_space<vmem>>, %arg11: memref<1x128xf32, #tpu.memory_space<vmem>>, %arg12: memref<1x128xf32, #tpu.memory_space<vmem>>, %arg13: memref<8x128xf32, #tpu.memory_space<vmem>>) attributes {dimension_semantics = [#tpu.dimension_semantics<parallel>], iteration_bounds = array<i64: 1>, scalar_prefetch = 0 : i64, scratch_operands = 0 : i64, tpu.core_type = #tpu.core_type<tc>, window_params = [{transform_indices = @transform_0, window_bounds = array<i64: 8, 128>}, {transform_indices = @transform_1, window_bounds = array<i64: 8, 128>}, {pipeline_mode = #tpu.pipeline_mode<synchronous>, transform_indices = @transform_2, window_bounds = array<i64: 8, 128>}, {pipeline_mode = #tpu.pipeline_mode<synchronous>, transform_indices = @transform_3, window_bounds = array<i64: 8, 128>}, {pipeline_mode = #tpu.pipeline_mode<synchronous>, transform_indices = @transform_4, window_bounds = array<i64: 128, 128>}, {pipeline_mode = #tpu.pipeline_mode<synchronous>, transform_indices = @transform_5, window_bounds = array<i64: 1, 128>}, {pipeline_mode = #tpu.pipeline_mode<synchronous>, transform_indices = @transform_6, window_bounds = array<i64: 128, 128>}, {pipeline_mode = #tpu.pipeline_mode<synchronous>, transform_indices = @transform_7, window_bounds = array<i64: 1, 128>}, {pipeline_mode = #tpu.pipeline_mode<synchronous>, transform_indices = @transform_8, window_bounds = array<i64: 1, 128>}, {pipeline_mode = #tpu.pipeline_mode<synchronous>, transform_indices = @transform_9, window_bounds = array<i64: 1, 128>}, {pipeline_mode = #tpu.pipeline_mode<synchronous>, transform_indices = @transform_10, window_bounds = array<i64: 1, 128>}, {pipeline_mode = #tpu.pipeline_mode<synchronous>, transform_indices = @transform_11, window_bounds = array<i64: 1, 128>}, {transform_indices = @transform_12, window_bounds = array<i64: 8, 128>}]} {
    %c0 = arith.constant 0 : index
    %c0_0 = arith.constant 0 : index
    %0 = vector.load %arg1[%c0, %c0_0] : memref<8x128xf32, #tpu.memory_space<vmem>>, vector<8x128xf32>
    %c0_1 = arith.constant 0 : index
    %c0_2 = arith.constant 0 : index
    %1 = vector.load %arg3[%c0_1, %c0_2] : memref<8x128xf32, #tpu.memory_space<vmem>>, vector<8x128xf32>
    %cst = arith.constant dense<0.000000e+00> : vector<8x8xf32>
    %2 = tpu.matmul %0, %1, %cst {dimension_numbers = #tpu.dot_dimension_numbers<[1], [1], [0], [0], [0, 0, 1, 0], [], []>} : vector<8x128xf32>, vector<8x128xf32>, vector<8x8xf32> -> vector<8x8xf32>
    %cst_3 = arith.constant dense<0xFF800000> : vector<8xf32>
    %3 = vector.multi_reduction <maximumf>, %2, %cst_3 [1] : vector<8x8xf32> to vector<8xf32>
    %4 = vector.shape_cast %3 : vector<8xf32> to vector<8x1xf32>
    %5 = vector.broadcast %4 : vector<8x1xf32> to vector<8x8xf32>
    %6 = arith.cmpf oge, %2, %5 : vector<8x8xf32>
    %cst_4 = arith.constant 0xFF800000 : f32
    %7 = vector.broadcast %cst_4 : f32 to vector<8x8xf32>
    %8 = arith.select %6, %7, %2 : vector<8x8xi1>, vector<8x8xf32>
    %cst_5 = arith.constant dense<0xFF800000> : vector<8xf32>
    %9 = vector.multi_reduction <maximumf>, %8, %cst_5 [1] : vector<8x8xf32> to vector<8xf32>
    %10 = vector.shape_cast %9 : vector<8xf32> to vector<8x1xf32>
    %11 = vector.broadcast %10 : vector<8x1xf32> to vector<8x8xf32>
    %12 = arith.cmpf oge, %8, %11 : vector<8x8xf32>
    %cst_6 = arith.constant 0xFF800000 : f32
    %13 = vector.broadcast %cst_6 : f32 to vector<8x8xf32>
    %14 = arith.select %12, %13, %8 : vector<8x8xi1>, vector<8x8xf32>
    %cst_7 = arith.constant dense<0xFF800000> : vector<8xf32>
    %15 = vector.multi_reduction <maximumf>, %14, %cst_7 [1] : vector<8x8xf32> to vector<8xf32>
    %16 = vector.shape_cast %15 : vector<8xf32> to vector<8x1xf32>
    %17 = vector.broadcast %16 : vector<8x1xf32> to vector<8x8xf32>
    %18 = arith.cmpf oge, %14, %17 : vector<8x8xf32>
    %cst_8 = arith.constant 0xFF800000 : f32
    %19 = vector.broadcast %cst_8 : f32 to vector<8x8xf32>
    %20 = arith.select %18, %19, %14 : vector<8x8xi1>, vector<8x8xf32>
    %cst_9 = arith.constant dense<0xFF800000> : vector<8xf32>
    %21 = vector.multi_reduction <maximumf>, %20, %cst_9 [1] : vector<8x8xf32> to vector<8xf32>
    %22 = vector.shape_cast %21 : vector<8xf32> to vector<8x1xf32>
    %cst_10 = arith.constant dense<0xFF800000> : vector<8xf32>
    %23 = vector.multi_reduction <maximumf>, %2, %cst_10 [1] : vector<8x8xf32> to vector<8xf32>
    %24 = vector.shape_cast %23 : vector<8xf32> to vector<8x1xf32>
    %25 = vector.broadcast %22 : vector<8x1xf32> to vector<8x8xf32>
    %26 = arith.cmpf oge, %2, %25 : vector<8x8xf32>
    %27 = vector.broadcast %24 : vector<8x1xf32> to vector<8x8xf32>
    %28 = arith.subf %2, %27 : vector<8x8xf32>
    %29 = math.exp %28 : vector<8x8xf32>
    %cst_11 = arith.constant 0.000000e+00 : f32
    %30 = vector.broadcast %cst_11 : f32 to vector<8x8xf32>
    %31 = arith.select %26, %29, %30 : vector<8x8xi1>, vector<8x8xf32>
    %cst_12 = arith.constant dense<0.000000e+00> : vector<8xf32>
    %32 = vector.multi_reduction <add>, %31, %cst_12 [1] : vector<8x8xf32> to vector<8xf32>
    %33 = vector.shape_cast %32 : vector<8xf32> to vector<8x1xf32>
    %c0_13 = arith.constant 0 : index
    %c0_14 = arith.constant 0 : index
    %34 = vector.load %arg4[%c0_13, %c0_14] : memref<8x128xf32, #tpu.memory_space<vmem>>, vector<8x128xf32>
    %cst_15 = arith.constant dense<0.000000e+00> : vector<8x128xf32>
    %35 = tpu.matmul %31, %34, %cst_15 {dimension_numbers = #tpu.dot_dimension_numbers<[1], [0], [0], [1], [0, 0, 1, 1], [], []>} : vector<8x8xf32>, vector<8x128xf32>, vector<8x128xf32> -> vector<8x128xf32>
    %36 = tpu.reciprocal %33 : vector<8x1xf32> -> vector<8x1xf32>
    %37 = vector.broadcast %36 : vector<8x1xf32> to vector<8x128xf32>
    %38 = arith.mulf %35, %37 : vector<8x128xf32>
    %c0_16 = arith.constant 0 : index
    %c0_17 = arith.constant 0 : index
    %39 = vector.load %arg2[%c0_16, %c0_17] : memref<8x128xf32, #tpu.memory_space<vmem>>, vector<8x128xf32>
    %40 = arith.addf %39, %38 : vector<8x128xf32>
    %c0_18 = arith.constant 0 : index
    %c0_19 = arith.constant 0 : index
    %41 = vector.load %arg9[%c0_18, %c0_19] : memref<1x128xf32, #tpu.memory_space<vmem>>, vector<1x128xf32>
    %c0_20 = arith.constant 0 : index
    %c0_21 = arith.constant 0 : index
    %42 = vector.load %arg10[%c0_20, %c0_21] : memref<1x128xf32, #tpu.memory_space<vmem>>, vector<1x128xf32>
    %cst_22 = arith.constant dense<0.000000e+00> : vector<8xf32>
    %43 = vector.multi_reduction <add>, %40, %cst_22 [1] : vector<8x128xf32> to vector<8xf32>
    %44 = vector.shape_cast %43 : vector<8xf32> to vector<8x1xf32>
    %cst_23 = arith.constant 3.125000e-02 : f32
    %45 = vector.broadcast %cst_23 : f32 to vector<8x1xf32>
    %46 = arith.mulf %44, %45 : vector<8x1xf32>
    %47 = tpu.iota {dimensions = array<i32: 1>} : vector<8x128xi32>
    %c32_i32 = arith.constant 32 : i32
    %48 = vector.broadcast %c32_i32 : i32 to vector<8x128xi32>
    %49 = arith.cmpi slt, %47, %48 : vector<8x128xi32>
    %50 = vector.broadcast %46 : vector<8x1xf32> to vector<8x128xf32>
    %51 = arith.subf %40, %50 : vector<8x128xf32>
    %cst_24 = arith.constant 0.000000e+00 : f32
    %52 = vector.broadcast %cst_24 : f32 to vector<8x128xf32>
    %53 = arith.select %49, %51, %52 : vector<8x128xi1>, vector<8x128xf32>
    %54 = arith.mulf %53, %53 : vector<8x128xf32>
    %cst_25 = arith.constant dense<0.000000e+00> : vector<8xf32>
    %55 = vector.multi_reduction <add>, %54, %cst_25 [1] : vector<8x128xf32> to vector<8xf32>
    %56 = vector.shape_cast %55 : vector<8xf32> to vector<8x1xf32>
    %cst_26 = arith.constant 3.125000e-02 : f32
    %57 = vector.broadcast %cst_26 : f32 to vector<8x1xf32>
    %58 = arith.mulf %56, %57 : vector<8x1xf32>
    %cst_27 = arith.constant 9.99999974E-6 : f32
    %59 = vector.broadcast %cst_27 : f32 to vector<8x1xf32>
    %60 = arith.addf %58, %59 : vector<8x1xf32>
    %61 = math.rsqrt %60 : vector<8x1xf32>
    %62 = vector.broadcast %61 : vector<8x1xf32> to vector<8x128xf32>
    %63 = arith.mulf %53, %62 : vector<8x128xf32>
    %64 = vector.broadcast %41 : vector<1x128xf32> to vector<8x128xf32>
    %65 = arith.mulf %63, %64 : vector<8x128xf32>
    %66 = vector.broadcast %42 : vector<1x128xf32> to vector<8x128xf32>
    %67 = arith.addf %65, %66 : vector<8x128xf32>
    %c0_28 = arith.constant 0 : index
    %c0_29 = arith.constant 0 : index
    %68 = vector.load %arg5[%c0_28, %c0_29] : memref<128x128xf32, #tpu.memory_space<vmem>>, vector<128x128xf32>
    %cst_30 = arith.constant dense<0.000000e+00> : vector<8x128xf32>
    %69 = tpu.matmul %67, %68, %cst_30 {dimension_numbers = #tpu.dot_dimension_numbers<[1], [0], [0], [1], [0, 0, 1, 1], [], []>} : vector<8x128xf32>, vector<128x128xf32>, vector<8x128xf32> -> vector<8x128xf32>
    %c0_31 = arith.constant 0 : index
    %c0_32 = arith.constant 0 : index
    %70 = vector.load %arg6[%c0_31, %c0_32] : memref<1x128xf32, #tpu.memory_space<vmem>>, vector<1x128xf32>
    %71 = vector.broadcast %70 : vector<1x128xf32> to vector<8x128xf32>
    %72 = arith.addf %69, %71 : vector<8x128xf32>
    %cst_33 = arith.constant 0.000000e+00 : f32
    %73 = vector.broadcast %cst_33 : f32 to vector<8x128xf32>
    %74 = arith.maximumf %72, %73 : vector<8x128xf32>
    %c0_34 = arith.constant 0 : index
    %c0_35 = arith.constant 0 : index
    %75 = vector.load %arg7[%c0_34, %c0_35] : memref<128x128xf32, #tpu.memory_space<vmem>>, vector<128x128xf32>
    %cst_36 = arith.constant dense<0.000000e+00> : vector<8x128xf32>
    %76 = tpu.matmul %74, %75, %cst_36 {dimension_numbers = #tpu.dot_dimension_numbers<[1], [0], [0], [1], [0, 0, 1, 1], [], []>} : vector<8x128xf32>, vector<128x128xf32>, vector<8x128xf32> -> vector<8x128xf32>
    %c0_37 = arith.constant 0 : index
    %c0_38 = arith.constant 0 : index
    %77 = vector.load %arg8[%c0_37, %c0_38] : memref<1x128xf32, #tpu.memory_space<vmem>>, vector<1x128xf32>
    %78 = vector.broadcast %77 : vector<1x128xf32> to vector<8x128xf32>
    %79 = arith.addf %76, %78 : vector<8x128xf32>
    %80 = arith.addf %67, %79 : vector<8x128xf32>
    %c0_39 = arith.constant 0 : index
    %c0_40 = arith.constant 0 : index
    %81 = vector.load %arg11[%c0_39, %c0_40] : memref<1x128xf32, #tpu.memory_space<vmem>>, vector<1x128xf32>
    %c0_41 = arith.constant 0 : index
    %c0_42 = arith.constant 0 : index
    %82 = vector.load %arg12[%c0_41, %c0_42] : memref<1x128xf32, #tpu.memory_space<vmem>>, vector<1x128xf32>
    %cst_43 = arith.constant dense<0.000000e+00> : vector<8xf32>
    %83 = vector.multi_reduction <add>, %80, %cst_43 [1] : vector<8x128xf32> to vector<8xf32>
    %84 = vector.shape_cast %83 : vector<8xf32> to vector<8x1xf32>
    %cst_44 = arith.constant 3.125000e-02 : f32
    %85 = vector.broadcast %cst_44 : f32 to vector<8x1xf32>
    %86 = arith.mulf %84, %85 : vector<8x1xf32>
    %87 = tpu.iota {dimensions = array<i32: 1>} : vector<8x128xi32>
    %c32_i32_45 = arith.constant 32 : i32
    %88 = vector.broadcast %c32_i32_45 : i32 to vector<8x128xi32>
    %89 = arith.cmpi slt, %87, %88 : vector<8x128xi32>
    %90 = vector.broadcast %86 : vector<8x1xf32> to vector<8x128xf32>
    %91 = arith.subf %80, %90 : vector<8x128xf32>
    %cst_46 = arith.constant 0.000000e+00 : f32
    %92 = vector.broadcast %cst_46 : f32 to vector<8x128xf32>
    %93 = arith.select %89, %91, %92 : vector<8x128xi1>, vector<8x128xf32>
    %94 = arith.mulf %93, %93 : vector<8x128xf32>
    %cst_47 = arith.constant dense<0.000000e+00> : vector<8xf32>
    %95 = vector.multi_reduction <add>, %94, %cst_47 [1] : vector<8x128xf32> to vector<8xf32>
    %96 = vector.shape_cast %95 : vector<8xf32> to vector<8x1xf32>
    %cst_48 = arith.constant 3.125000e-02 : f32
    %97 = vector.broadcast %cst_48 : f32 to vector<8x1xf32>
    %98 = arith.mulf %96, %97 : vector<8x1xf32>
    %cst_49 = arith.constant 9.99999974E-6 : f32
    %99 = vector.broadcast %cst_49 : f32 to vector<8x1xf32>
    %100 = arith.addf %98, %99 : vector<8x1xf32>
    %101 = math.rsqrt %100 : vector<8x1xf32>
    %102 = vector.broadcast %101 : vector<8x1xf32> to vector<8x128xf32>
    %103 = arith.mulf %93, %102 : vector<8x128xf32>
    %104 = vector.broadcast %81 : vector<1x128xf32> to vector<8x128xf32>
    %105 = arith.mulf %103, %104 : vector<8x128xf32>
    %106 = vector.broadcast %82 : vector<1x128xf32> to vector<8x128xf32>
    %107 = arith.addf %105, %106 : vector<8x128xf32>
    %c0_50 = arith.constant 0 : index
    %c0_51 = arith.constant 0 : index
    %108 = vector.load %arg13[%c0_50, %c0_51] : memref<8x128xf32, #tpu.memory_space<vmem>>, vector<8x128xf32>
    tpu.vector_store %arg13[%c0_50, %c0_51], %107 {strides = array<i32>} : memref<8x128xf32, #tpu.memory_space<vmem>>, vector<8x128xf32>,
    return
  }
  func.func @transform_0(%arg0: i32) -> (i32, i32) {
    %c0_i32 = arith.constant 0 : i32
    %c0_i32_0 = arith.constant 0 : i32
    return %arg0, %c0_i32 : i32, i32
  }
  func.func @transform_1(%arg0: i32) -> (i32, i32) {
    %c0_i32 = arith.constant 0 : i32
    %c0_i32_0 = arith.constant 0 : i32
    return %arg0, %c0_i32 : i32, i32
  }
  func.func @transform_2(%arg0: i32) -> (i32, i32) {
    %c0_i32 = arith.constant 0 : i32
    %c0_i32_0 = arith.constant 0 : i32
    %c0_i32_1 = arith.constant 0 : i32
    return %c0_i32, %c0_i32_0 : i32, i32
  }
  func.func @transform_3(%arg0: i32) -> (i32, i32) {
    %c0_i32 = arith.constant 0 : i32
    %c0_i32_0 = arith.constant 0 : i32
    %c0_i32_1 = arith.constant 0 : i32
    return %c0_i32, %c0_i32_0 : i32, i32
  }
  func.func @transform_4(%arg0: i32) -> (i32, i32) {
    %c0_i32 = arith.constant 0 : i32
    %c0_i32_0 = arith.constant 0 : i32
    %c0_i32_1 = arith.constant 0 : i32
    return %c0_i32, %c0_i32_0 : i32, i32
  }
  func.func @transform_5(%arg0: i32) -> (i32, i32) {
    %c0_i32 = arith.constant 0 : i32
    %c0_i32_0 = arith.constant 0 : i32
    %c0_i32_1 = arith.constant 0 : i32
    return %c0_i32, %c0_i32_0 : i32, i32
  }
  func.func @transform_6(%arg0: i32) -> (i32, i32) {
    %c0_i32 = arith.constant 0 : i32
    %c0_i32_0 = arith.constant 0 : i32
    %c0_i32_1 = arith.constant 0 : i32
    return %c0_i32, %c0_i32_0 : i32, i32
  }
  func.func @transform_7(%arg0: i32) -> (i32, i32) {
    %c0_i32 = arith.constant 0 : i32
    %c0_i32_0 = arith.constant 0 : i32
    %c0_i32_1 = arith.constant 0 : i32
    return %c0_i32, %c0_i32_0 : i32, i32
  }
  func.func @transform_8(%arg0: i32) -> (i32, i32) {
    %c0_i32 = arith.constant 0 : i32
    %c0_i32_0 = arith.constant 0 : i32
    %c0_i32_1 = arith.constant 0 : i32
    return %c0_i32, %c0_i32_0 : i32, i32
  }
  func.func @transform_9(%arg0: i32) -> (i32, i32) {
    %c0_i32 = arith.constant 0 : i32
    %c0_i32_0 = arith.constant 0 : i32
    %c0_i32_1 = arith.constant 0 : i32
    return %c0_i32, %c0_i32_0 : i32, i32
  }
  func.func @transform_10(%arg0: i32) -> (i32, i32) {
    %c0_i32 = arith.constant 0 : i32
    %c0_i32_0 = arith.constant 0 : i32
    %c0_i32_1 = arith.constant 0 : i32
    return %c0_i32, %c0_i32_0 : i32, i32
  }
  func.func @transform_11(%arg0: i32) -> (i32, i32) {
    %c0_i32 = arith.constant 0 : i32
    %c0_i32_0 = arith.constant 0 : i32
    %c0_i32_1 = arith.constant 0 : i32
    return %c0_i32, %c0_i32_0 : i32, i32
  }
  func.func @transform_12(%arg0: i32) -> (i32, i32) {
    %c0_i32 = arith.constant 0 : i32
    %c0_i32_0 = arith.constant 0 : i32
    return %arg0, %c0_i32 : i32, i32
  }
}

</mosaic_0001>

<llo_original>
// kernel: tpu_custom_call.1
$region0: #{tpu_custom_call.1}
  #allocation0 [shape = 'u32[]', space=smem, size = 0x4, offset = 0x4, fixed_abs, tag = 'smem constant byte address 0x4 - core index']
  #allocation1 [shape = 'u32[144,128]{1,0:T(1,128)}', space=vmem, size = 0x12000, scoped, tag = 'internal scratch']
  %s0 = inlined_call_operand.hbm [shape: f32[8,128], index: 0, kind: input, shape index: {}]
  %s1 = inlined_call_operand.hbm [shape: f32[8,128], index: 1, kind: input, shape index: {}]
  %s2 = inlined_call_operand.hbm [shape: f32[8,128], index: 2, kind: input, shape index: {}]
  %s3 = inlined_call_operand.hbm [shape: f32[8,128], index: 3, kind: input, shape index: {}]
  %s4 = inlined_call_operand.hbm [shape: f32[128,128], index: 4, kind: input, shape index: {}]
  %s5 = inlined_call_operand.vmem [shape: f32[1,128], index: 5, kind: input, shape index: {}]
  %s6 = inlined_call_operand.hbm [shape: f32[128,128], index: 6, kind: input, shape index: {}]
  %s7 = inlined_call_operand.vmem [shape: f32[1,128], index: 7, kind: input, shape index: {}]
  %s8 = inlined_call_operand.vmem [shape: f32[1,128], index: 8, kind: input, shape index: {}]
  %s9 = inlined_call_operand.vmem [shape: f32[1,128], index: 9, kind: input, shape index: {}]
  %s10 = inlined_call_operand.vmem [shape: f32[1,128], index: 10, kind: input, shape index: {}]
  %s11 = inlined_call_operand.vmem [shape: f32[1,128], index: 11, kind: input, shape index: {}]
  %s12 = inlined_call_operand.hbm [shape: f32[8,128], index: 12, kind: output, shape index: {}]
  %s13 = sld [smem:[#allocation0]]
  $region82: #{tpu_custom_call.1} parent=0
    _
  %s15 = ssub.s32 1, %s13
  %s16 = scalar_select 0, %s15, %s13
  $region1: #{tpu_custom_call.1} parent=0
    #allocation2 [shape = 'u8[4096]{0}', space=vmem, size = 0x1000, scoped, tag = 'input window, operand 0, single buffered']
    #allocation3 [shape = 's32[1]{0}', space=sflag, size = 0x4, scoped, tag = 'scoped memory for tpu_custom_call.1']
    #allocation4 [shape = 's32[1]{0}', space=sflag, size = 0x4, scoped, tag = 'scoped memory for tpu_custom_call.1']
    #allocation5 [shape = 'u8[4096]{0}', space=vmem, size = 0x1000, scoped, tag = 'input window, operand 1, single buffered']
    #allocation6 [shape = 's32[1]{0}', space=sflag, size = 0x4, scoped, tag = 'scoped memory for tpu_custom_call.1']
    #allocation7 [shape = 'u8[4096]{0}', space=vmem, size = 0x1000, scoped, tag = 'input window, operand 2, single buffered']
    #allocation8 [shape = 'u8[4096]{0}', space=vmem, size = 0x1000, scoped, tag = 'input window, operand 3, single buffered']
    #allocation9 [shape = 's32[1]{0}', space=sflag, size = 0x4, scoped, tag = 'scoped memory for tpu_custom_call.1']
    #allocation10 [shape = 'u8[65536]{0}', space=vmem, size = 0x10000, scoped, tag = 'input window, operand 4, single buffered']
    #allocation11 [shape = 'u8[65536]{0}', space=vmem, size = 0x10000, scoped, tag = 'input window, operand 6, single buffered']
    #allocation12 [shape = 's32[1]{0}', space=sflag, size = 0x4, scoped, tag = 'scoped memory for tpu_custom_call.1']
    #allocation13 [shape = 'u8[4096]{0}', space=vmem, size = 0x1000, scoped, tag = 'output window, operand 0, single buffered']
    %17 = vsyncpa [#allocation3], 0
    %18 = vsyncpa [#allocation6], 0
    %19 = vsyncpa [#allocation9], 0
    %20 = vsyncpa [#allocation12], 0
    %21 = vsyncpa [#allocation4], 0
    // Predicated region
    $region2: #{tpu_custom_call.1} parent=1 // pred_check
      _
    $region3: #{tpu_custom_call.1} parent=1 // pred_check_branch
      %23 = sbr.rel (0) target = $region5
    $region4: #{tpu_custom_call.1} parent=1 // pred_region
      %s25 = ssub.s32 128, 128
      %26 = vsyncadd [#allocation3], %s25
      %s28 = sshll.u32 [#allocation2], 4
      %s29 = int_to_ptr.vmem [resolvable:$true] %s28
      %31 = dma.hbm_to_vmem [thread:$0]  %s0, 128, %s29, [#allocation3]
    $region5: #{tpu_custom_call.1} parent=1 // pred_fallthru
      _
    // Predicated region
    $region6: #{tpu_custom_call.1} parent=1 // pred_check
      _
    $region7: #{tpu_custom_call.1} parent=1 // pred_check_branch
      %33 = sbr.rel (0) target = $region9
    $region8: #{tpu_custom_call.1} parent=1 // pred_region
      %s35 = ssub.s32 128, 128
      %36 = vsyncadd [#allocation6], %s35
      %s38 = sshll.u32 [#allocation5], 4
      %s39 = int_to_ptr.vmem [resolvable:$true] %s38
      %41 = dma.hbm_to_vmem [thread:$0]  %s1, 128, %s39, [#allocation6]
    $region9: #{tpu_custom_call.1} parent=1 // pred_fallthru
      _
    // Predicated region
    $region10: #{tpu_custom_call.1} parent=1 // pred_check
      _
    $region11: #{tpu_custom_call.1} parent=1 // pred_check_branch
      %43 = sbr.rel (0) target = $region13
    $region12: #{tpu_custom_call.1} parent=1 // pred_region
      %s45 = ssub.s32 128, 128
      %46 = vsyncadd [#allocation6], %s45
      %s48 = sshll.u32 [#allocation7], 4
      %s49 = int_to_ptr.vmem [resolvable:$true] %s48
      %51 = dma.hbm_to_vmem [thread:$0]  %s2, 128, %s49, [#allocation6]
    $region13: #{tpu_custom_call.1} parent=1 // pred_fallthru
      _
    // Predicated region
    $region14: #{tpu_custom_call.1} parent=1 // pred_check
      _
    $region15: #{tpu_custom_call.1} parent=1 // pred_check_branch
      %53 = sbr.rel (0) target = $region17
    $region16: #{tpu_custom_call.1} parent=1 // pred_region
      %s55 = ssub.s32 128, 128
      %56 = vsyncadd [#allocation9], %s55
      %s58 = sshll.u32 [#allocation8], 4
      %s59 = int_to_ptr.vmem [resolvable:$true] %s58
      %61 = dma.hbm_to_vmem [thread:$0]  %s3, 128, %s59, [#allocation9]
    $region17: #{tpu_custom_call.1} parent=1 // pred_fallthru
      _
    // Predicated region
    $region18: #{tpu_custom_call.1} parent=1 // pred_check
      _
    $region19: #{tpu_custom_call.1} parent=1 // pred_check_branch
      %63 = sbr.rel (0) target = $region21
    $region20: #{tpu_custom_call.1} parent=1 // pred_region
      %s65 = ssub.s32 2048, 2048
      %66 = vsyncadd [#allocation9], %s65
      %s67 = sshll.u32 [#allocation10], 4
      %s68 = int_to_ptr.vmem [resolvable:$true] %s67
      %73 = dma.hbm_to_vmem [thread:$0]  %s4, 2048, %s68, [#allocation9], 128, 128, 8
    $region21: #{tpu_custom_call.1} parent=1 // pred_fallthru
      _
    // Predicated region
    $region22: #{tpu_custom_call.1} parent=1 // pred_check
      _
    $region23: #{tpu_custom_call.1} parent=1 // pred_check_branch
      %75 = sbr.rel (0) target = $region25
    $region24: #{tpu_custom_call.1} parent=1 // pred_region
      _
    $region25: #{tpu_custom_call.1} parent=1 // pred_fallthru
      _
    // Predicated region
    $region26: #{tpu_custom_call.1} parent=1 // pred_check
      _
    $region27: #{tpu_custom_call.1} parent=1 // pred_check_branch
      %77 = sbr.rel (0) target = $region29
    $region28: #{tpu_custom_call.1} parent=1 // pred_region
      %s79 = ssub.s32 2048, 2048
      %80 = vsyncadd [#allocation12], %s79
      %s81 = sshll.u32 [#allocation11], 4
      %s82 = int_to_ptr.vmem [resolvable:$true] %s81
      %87 = dma.hbm_to_vmem [thread:$0]  %s6, 2048, %s82, [#allocation12], 128, 128, 8
    $region29: #{tpu_custom_call.1} parent=1 // pred_fallthru
      _
    // Predicated region
    $region30: #{tpu_custom_call.1} parent=1 // pred_check
      _
    $region31: #{tpu_custom_call.1} parent=1 // pred_check_branch
      %89 = sbr.rel (0) target = $region33
    $region32: #{tpu_custom_call.1} parent=1 // pred_region
      _
    $region33: #{tpu_custom_call.1} parent=1 // pred_fallthru
      _
    // Predicated region
    $region34: #{tpu_custom_call.1} parent=1 // pred_check
      _
    $region35: #{tpu_custom_call.1} parent=1 // pred_check_branch
      %91 = sbr.rel (0) target = $region37
    $region36: #{tpu_custom_call.1} parent=1 // pred_region
      _
    $region37: #{tpu_custom_call.1} parent=1 // pred_fallthru
      _
    // Predicated region
    $region38: #{tpu_custom_call.1} parent=1 // pred_check
      _
    $region39: #{tpu_custom_call.1} parent=1 // pred_check_branch
      %93 = sbr.rel (0) target = $region41
    $region40: #{tpu_custom_call.1} parent=1 // pred_region
      _
    $region41: #{tpu_custom_call.1} parent=1 // pred_fallthru
      _
    // Predicated region
    $region42: #{tpu_custom_call.1} parent=1 // pred_check
      _
    $region43: #{tpu_custom_call.1} parent=1 // pred_check_branch
      %95 = sbr.rel (0) target = $region45
    $region44: #{tpu_custom_call.1} parent=1 // pred_region
      _
    $region45: #{tpu_custom_call.1} parent=1 // pred_fallthru
      _
    // Predicated region
    $region46: #{tpu_custom_call.1} parent=1 // pred_check
      _
    $region47: #{tpu_custom_call.1} parent=1 // pred_check_branch
      %97 = sbr.rel (0) target = $region49
    $region48: #{tpu_custom_call.1} parent=1 // pred_region
      _
    $region49: #{tpu_custom_call.1} parent=1 // pred_fallthru
      _
    // Predicated region
    $region50: #{tpu_custom_call.1} parent=1 // pred_check
      _
    $region51: #{tpu_custom_call.1} parent=1 // pred_check_branch
      %99 = sbr.rel (0) target = $region53
    $region52: #{tpu_custom_call.1} parent=1 // pred_region
      %100 = dma.done [#allocation3], 128
    $region53: #{tpu_custom_call.1} parent=1 // pred_fallthru
      _
    // Predicated region
    $region54: #{tpu_custom_call.1} parent=1 // pred_check
      _
    $region55: #{tpu_custom_call.1} parent=1 // pred_check_branch
      %102 = sbr.rel (0) target = $region57
    $region56: #{tpu_custom_call.1} parent=1 // pred_region
      %103 = dma.done [#allocation6], 128
    $region57: #{tpu_custom_call.1} parent=1 // pred_fallthru
      _
    // Predicated region
    $region58: #{tpu_custom_call.1} parent=1 // pred_check
      _
    $region59: #{tpu_custom_call.1} parent=1 // pred_check_branch
      %105 = sbr.rel (0) target = $region61
    $region60: #{tpu_custom_call.1} parent=1 // pred_region
      %106 = dma.done [#allocation6], 128
    $region61: #{tpu_custom_call.1} parent=1 // pred_fallthru
      _
    // Predicated region
    $region62: #{tpu_custom_call.1} parent=1 // pred_check
      _
    $region63: #{tpu_custom_call.1} parent=1 // pred_check_branch
      %108 = sbr.rel (0) target = $region65
    $region64: #{tpu_custom_call.1} parent=1 // pred_region
      %109 = dma.done [#allocation9], 128
    $region65: #{tpu_custom_call.1} parent=1 // pred_fallthru
      _
    // Predicated region
    $region66: #{tpu_custom_call.1} parent=1 // pred_check
      _
    $region67: #{tpu_custom_call.1} parent=1 // pred_check_branch
      %111 = sbr.rel (0) target = $region69
    $region68: #{tpu_custom_call.1} parent=1 // pred_region
      %112 = dma.done [#allocation9], 2048
    $region69: #{tpu_custom_call.1} parent=1 // pred_fallthru
      _
    // Predicated region
    $region70: #{tpu_custom_call.1} parent=1 // pred_check
      _
    $region71: #{tpu_custom_call.1} parent=1 // pred_check_branch
      %114 = sbr.rel (0) target = $region73
    $region72: #{tpu_custom_call.1} parent=1 // pred_region
      %115 = dma.done [#allocation12], 2048
    $region73: #{tpu_custom_call.1} parent=1 // pred_fallthru
      _
    %v116 = vld [vmem:[#allocation2] sm:$0xff]
    %v117 = vld [vmem:[#allocation7] sm:$0xff]
    %118 = vmatprep.subr.mxu0 0.0
    %119 = vmatpush1.xpose.msra.mxu0 0.0
    %120 = vmatprep.subr.mxu0 0.0
    %121 = vmatpush1.xpose.msra.mxu0 0.0
    %122 = vmatprep.subr.mxu0 0.0
    %123 = vmatpush1.xpose.msra.mxu0 0.0
    %124 = vmatprep.subr.mxu0 0.0
    %125 = vmatpush1.xpose.msra.mxu0 0.0
    %126 = vmatprep.subr.mxu0 0.0
    %127 = vmatpush1.xpose.msra.mxu0 0.0
    %128 = vmatprep.subr.mxu0 0.0
    %129 = vmatpush1.xpose.msra.mxu0 0.0
    %130 = vmatprep.subr.mxu0 0.0
    %131 = vmatpush1.xpose.msra.mxu0 0.0
    %132 = vmatprep.subr.mxu0 0.0
    %133 = vmatpush1.xpose.msra.mxu0 0.0
    %134 = vmatprep.subr.mxu0 0.0
    %135 = vmatpush1.xpose.msra.mxu0 0.0
    %136 = vmatprep.subr.mxu0 0.0
    %137 = vmatpush1.xpose.msra.mxu0 0.0
    %138 = vmatprep.subr.mxu0 0.0
    %139 = vmatpush1.xpose.msra.mxu0 0.0
    %140 = vmatprep.subr.mxu0 0.0
    %141 = vmatpush1.xpose.msra.mxu0 0.0
    %142 = vmatprep.subr.mxu0 0.0
    %143 = vmatpush1.xpose.msra.mxu0 0.0
    %144 = vmatprep.subr.mxu0 0.0
    %145 = vmatpush1.xpose.msra.mxu0 0.0
    %146 = vmatprep.subr.mxu0 0.0
    %147 = vmatpush1.xpose.msra.mxu0 0.0
    %148 = vmatprep.subr.mxu0 0.0
    %149 = vmatpush1.xpose.msra.mxu0 %v117
    %150 = vmatprep.subr.mxu0 0.0
    %151 = vmatpush2.xpose.msra.mxu0 0.0
    %152 = vmatprep.subr.mxu0 0.0
    %153 = vmatpush2.xpose.msra.mxu0 0.0
    %154 = vmatprep.subr.mxu0 0.0
    %155 = vmatpush2.xpose.msra.mxu0 0.0
    %156 = vmatprep.subr.mxu0 0.0
    %157 = vmatpush2.xpose.msra.mxu0 0.0
    %158 = vmatprep.subr.mxu0 0.0
    %159 = vmatpush2.xpose.msra.mxu0 0.0
    %160 = vmatprep.subr.mxu0 0.0
    %161 = vmatpush2.xpose.msra.mxu0 0.0
    %162 = vmatprep.subr.mxu0 0.0
    %163 = vmatpush2.xpose.msra.mxu0 0.0
    %164 = vmatprep.subr.mxu0 0.0
    %165 = vmatpush2.xpose.msra.mxu0 0.0
    %166 = vmatprep.subr.mxu0 0.0
    %167 = vmatpush2.xpose.msra.mxu0 0.0
    %168 = vmatprep.subr.mxu0 0.0
    %169 = vmatpush2.xpose.msra.mxu0 0.0
    %170 = vmatprep.subr.mxu0 0.0
    %171 = vmatpush2.xpose.msra.mxu0 0.0
    %172 = vmatprep.subr.mxu0 0.0
    %173 = vmatpush2.xpose.msra.mxu0 0.0
    %174 = vmatprep.subr.mxu0 0.0
    %175 = vmatpush2.xpose.msra.mxu0 0.0
    %176 = vmatprep.subr.mxu0 0.0
    %177 = vmatpush2.xpose.msra.mxu0 0.0
    %178 = vmatprep.subr.mxu0 0.0
    %179 = vmatpush2.xpose.msra.mxu0 0.0
    %180 = vmatprep.subr.mxu0 0.0
    %181 = vmatpush2.xpose.msra.mxu0 0.0
    %182 = vmatprep.mubr.f32.mxu0 0.0
    %183 = vmatmul.mubr.f32.gmra.mxu0 %v116
    %v184 = vpop.f32.mrf.mxu0
    %v185 = vadd.f32 0.0, %v184
    %v186 = vpop.f32.mrf.mxu0
    %187 = vdwg.mxu0
    %vm188 = vcmask 64512
    %v189 = vsel %vm188, %v185, -inf
    %190 = vmax.xlane.f32.xlu0 %v189
    %v191 = vpop.xlane.xlu0 %190
    %vm192 = vcmp.ge.f32.partialorder %v185, %v191
    %v193 = vsel %vm192, -inf, %v185
    %v194 = vsel %vm188, %v193, -inf
    %195 = vmax.xlane.f32.xlu0 %v194
    %v196 = vpop.xlane.xlu0 %195
    %vm197 = vcmp.ge.f32.partialorder %v193, %v196
    %v198 = vsel %vm197, -inf, %v193
    %v199 = vsel %vm188, %v198, -inf
    %200 = vmax.xlane.f32.xlu0 %v199
    %v201 = vpop.xlane.xlu0 %200
    %vm202 = vcmp.ge.f32.partialorder %v198, %v201
    %v203 = vsel %vm202, -inf, %v198
    %v204 = vsel %vm188, %v203, -inf
    %205 = vmax.xlane.f32.xlu0 %v204
    %v206 = vpop.xlane.xlu0 %205
    %vm207 = vcmp.ge.f32.partialorder %v185, %v206
    %v208 = vsub.f32 %v185, %v191
    %v209 = vmul.f32 %v208, 1.442695
    %v210 = vpow.pop %v209
    %v211 = vsel %vm207, %v210, 0.0
    %v212 = vsel %vm188, %v211, 0.0
    %213 = vadd.xlane.f32.xlu0 %v212
    %v214 = vpop.xlane.xlu0 %213
    %v215 = vld [vmem:[#allocation8] sm:$0xff]
    %v217 = vsel %vm188, %v211, 0
    %219 = vmatprep.subr.mxu0 0.0
    %220 = vmatpush1.msra.mxu0 0.0
    %221 = vmatprep.subr.mxu0 0.0
    %222 = vmatpush1.msra.mxu0 0.0
    %223 = vmatprep.subr.mxu0 0.0
    %224 = vmatpush1.msra.mxu0 0.0
    %225 = vmatprep.subr.mxu0 0.0
    %226 = vmatpush1.msra.mxu0 0.0
    %227 = vmatprep.subr.mxu0 0.0
    %228 = vmatpush1.msra.mxu0 0.0
    %229 = vmatprep.subr.mxu0 0.0
    %230 = vmatpush1.msra.mxu0 0.0
    %231 = vmatprep.subr.mxu0 0.0
    %232 = vmatpush1.msra.mxu0 0.0
    %233 = vmatprep.subr.mxu0 0.0
    %234 = vmatpush1.msra.mxu0 0.0
    %235 = vmatprep.subr.mxu0 0.0
    %236 = vmatpush1.msra.mxu0 0.0
    %237 = vmatprep.subr.mxu0 0.0
    %238 = vmatpush1.msra.mxu0 0.0
    %239 = vmatprep.subr.mxu0 0.0
    %240 = vmatpush1.msra.mxu0 0.0
    %241 = vmatprep.subr.mxu0 0.0
    %242 = vmatpush1.msra.mxu0 0.0
    %243 = vmatprep.subr.mxu0 0.0
    %244 = vmatpush1.msra.mxu0 0.0
    %245 = vmatprep.subr.mxu0 0.0
    %246 = vmatpush1.msra.mxu0 0.0
    %247 = vmatprep.subr.mxu0 0.0
    %248 = vmatpush1.msra.mxu0 0.0
    %249 = vmatprep.subr.mxu0 0.0
    %250 = vmatpush1.msra.mxu0 %v215
    %251 = vmatprep.subr.mxu0 0.0
    %252 = vmatpush2.msra.mxu0 0.0
    %253 = vmatprep.subr.mxu0 0.0
    %254 = vmatpush2.msra.mxu0 0.0
    %255 = vmatprep.subr.mxu0 0.0
    %256 = vmatpush2.msra.mxu0 0.0
    %257 = vmatprep.subr.mxu0 0.0
    %258 = vmatpush2.msra.mxu0 0.0
    %259 = vmatprep.subr.mxu0 0.0
    %260 = vmatpush2.msra.mxu0 0.0
    %261 = vmatprep.subr.mxu0 0.0
    %262 = vmatpush2.msra.mxu0 0.0
    %263 = vmatprep.subr.mxu0 0.0
    %264 = vmatpush2.msra.mxu0 0.0
    %265 = vmatprep.subr.mxu0 0.0
    %266 = vmatpush2.msra.mxu0 0.0
    %267 = vmatprep.subr.mxu0 0.0
    %268 = vmatpush2.msra.mxu0 0.0
    %269 = vmatprep.subr.mxu0 0.0
    %270 = vmatpush2.msra.mxu0 0.0
    %271 = vmatprep.subr.mxu0 0.0
    %272 = vmatpush2.msra.mxu0 0.0
    %273 = vmatprep.subr.mxu0 0.0
    %274 = vmatpush2.msra.mxu0 0.0
    %275 = vmatprep.subr.mxu0 0.0
    %276 = vmatpush2.msra.mxu0 0.0
    %277 = vmatprep.subr.mxu0 0.0
    %278 = vmatpush2.msra.mxu0 0.0
    %279 = vmatprep.subr.mxu0 0.0
    %280 = vmatpush2.msra.mxu0 0.0
    %281 = vmatprep.subr.mxu0 0.0
    %282 = vmatpush2.msra.mxu0 0.0
    %283 = vmatprep.mubr.f32.mxu0 0.0
    %284 = vmatmul.mubr.f32.gmra.mxu0 %v217
    %v285 = vpop.f32.mrf.mxu0
    %v286 = vadd.f32 0.0, %v285
    %v287 = vpop.f32.mrf.mxu0
    %288 = vdwg.mxu0
    %v289 = vrcp.pop %v214
    %v290 = vmul.f32 %v286, %v289
    %v291 = vld [vmem:[#allocation5] sm:$0xff]
    %v292 = vadd.f32 %v291, %v290
    %v293 = vld [vmem:[%s8] sm:$0x1]
    %v294 = vld [vmem:[%s9] sm:$0x1]
    %295 = vadd.xlane.f32.xlu0 %v292
    %v296 = vpop.xlane.xlu0 %295
    %v297 = vmul.f32 %v296, 0.03125
    %v298 = vlaneseq
    %v299 = vand.u32 %v298, 127
    %vm300 = vcmp.lt.s32.totalorder %v299, 32
    %v301 = vsub.f32 %v292, %v297
    %v302 = vsel %vm300, %v301, 0.0
    %v303 = vmul.f32 %v302, %v302
    %304 = vadd.xlane.f32.xlu0 %v303
    %v305 = vpop.xlane.xlu0 %304
    %v306 = vmul.f32 %v305, 0.03125
    %v307 = vadd.f32 %v306, 1e-05
    %v308 = vrsqrt.pop %v307
    %v309 = vmul.f32 %v302, %v308
    %v311 = vlaneseq
    %v312 = vshrl.u32 %v311, 7
    %v313 = vsub.s32 0, %v312
    %v314 = vrot.slane %v293, %v313
    %v316 = vmul.f32 %v309, %v314
    %v318 = vlaneseq
    %v319 = vshrl.u32 %v318, 7
    %v320 = vsub.s32 0, %v319
    %v321 = vrot.slane %v294, %v320
    %v323 = vadd.f32 %v316, %v321
    %v324 = vld [vmem:[#allocation10] sm:$0xff]
    %v325 = vld [vmem:[#allocation10 + $0x8] sm:$0xff]
    %v326 = vld [vmem:[#allocation10 + $0x10] sm:$0xff]
    %v327 = vld [vmem:[#allocation10 + $0x18] sm:$0xff]
    %v328 = vld [vmem:[#allocation10 + $0x20] sm:$0xff]
    %v329 = vld [vmem:[#allocation10 + $0x28] sm:$0xff]
    %v330 = vld [vmem:[#allocation10 + $0x30] sm:$0xff]
    %v331 = vld [vmem:[#allocation10 + $0x38] sm:$0xff]
    %v332 = vld [vmem:[#allocation10 + $0x40] sm:$0xff]
    %v333 = vld [vmem:[#allocation10 + $0x48] sm:$0xff]
    %v334 = vld [vmem:[#allocation10 + $0x50] sm:$0xff]
    %v335 = vld [vmem:[#allocation10 + $0x58] sm:$0xff]
    %v336 = vld [vmem:[#allocation10 + $0x60] sm:$0xff]
    %v337 = vld [vmem:[#allocation10 + $0x68] sm:$0xff]
    %v338 = vld [vmem:[#allocation10 + $0x70] sm:$0xff]
    %v339 = vld [vmem:[#allocation10 + $0x78] sm:$0xff]
    %v340 = vld [vmem:[%s5] sm:$0x1]
    %v342 = vlaneseq
    %v343 = vshrl.u32 %v342, 7
    %v344 = vsub.s32 0, %v343
    %v345 = vrot.slane %v340, %v344
    %347 = vmatprep.subr.mxu0 0.0
    %348 = vmatpush1.msra.mxu0 %v339
    %349 = vmatprep.subr.mxu0 0.0
    %350 = vmatpush1.msra.mxu0 %v338
    %351 = vmatprep.subr.mxu0 0.0
    %352 = vmatpush1.msra.mxu0 %v337
    %353 = vmatprep.subr.mxu0 0.0
    %354 = vmatpush1.msra.mxu0 %v336
    %355 = vmatprep.subr.mxu0 0.0
    %356 = vmatpush1.msra.mxu0 %v335
    %357 = vmatprep.subr.mxu0 0.0
    %358 = vmatpush1.msra.mxu0 %v334
    %359 = vmatprep.subr.mxu0 0.0
    %360 = vmatpush1.msra.mxu0 %v333
    %361 = vmatprep.subr.mxu0 0.0
    %362 = vmatpush1.msra.mxu0 %v332
    %363 = vmatprep.subr.mxu0 0.0
    %364 = vmatpush1.msra.mxu0 %v331
    %365 = vmatprep.subr.mxu0 0.0
    %366 = vmatpush1.msra.mxu0 %v330
    %367 = vmatprep.subr.mxu0 0.0
    %368 = vmatpush1.msra.mxu0 %v329
    %369 = vmatprep.subr.mxu0 0.0
    %370 = vmatpush1.msra.mxu0 %v328
    %371 = vmatprep.subr.mxu0 0.0
    %372 = vmatpush1.msra.mxu0 %v327
    %373 = vmatprep.subr.mxu0 0.0
    %374 = vmatpush1.msra.mxu0 %v326
    %375 = vmatprep.subr.mxu0 0.0
    %376 = vmatpush1.msra.mxu0 %v325
    %377 = vmatprep.subr.mxu0 0.0
    %378 = vmatpush1.msra.mxu0 %v324
    %379 = vmatprep.subr.mxu0 0.0
    %380 = vmatpush2.msra.mxu0 0.0
    %381 = vmatprep.subr.mxu0 0.0
    %382 = vmatpush2.msra.mxu0 0.0
    %383 = vmatprep.subr.mxu0 0.0
    %384 = vmatpush2.msra.mxu0 0.0
    %385 = vmatprep.subr.mxu0 0.0
    %386 = vmatpush2.msra.mxu0 0.0
    %387 = vmatprep.subr.mxu0 0.0
    %388 = vmatpush2.msra.mxu0 0.0
    %389 = vmatprep.subr.mxu0 0.0
    %390 = vmatpush2.msra.mxu0 0.0
    %391 = vmatprep.subr.mxu0 0.0
    %392 = vmatpush2.msra.mxu0 0.0
    %393 = vmatprep.subr.mxu0 0.0
    %394 = vmatpush2.msra.mxu0 0.0
    %395 = vmatprep.subr.mxu0 0.0
    %396 = vmatpush2.msra.mxu0 0.0
    %397 = vmatprep.subr.mxu0 0.0
    %398 = vmatpush2.msra.mxu0 0.0
    %399 = vmatprep.subr.mxu0 0.0
    %400 = vmatpush2.msra.mxu0 0.0
    %401 = vmatprep.subr.mxu0 0.0
    %402 = vmatpush2.msra.mxu0 0.0
    %403 = vmatprep.subr.mxu0 0.0
    %404 = vmatpush2.msra.mxu0 0.0
    %405 = vmatprep.subr.mxu0 0.0
    %406 = vmatpush2.msra.mxu0 0.0
    %407 = vmatprep.subr.mxu0 0.0
    %408 = vmatpush2.msra.mxu0 0.0
    %409 = vmatprep.subr.mxu0 0.0
    %410 = vmatpush2.msra.mxu0 0.0
    %411 = vmatprep.mubr.f32.mxu0 0.0
    %412 = vmatmul.mubr.f32.gmra.mxu0 %v323
    %v413 = vpop.f32.mrf.mxu0
    %v414 = vadd.f32 %v345, %v413
    %v415 = vpop.f32.mrf.mxu0
    %416 = vdwg.mxu0
    %v417 = vmax.f32 %v414, 0.0
    %v418 = vld [vmem:[#allocation11] sm:$0xff]
    %v419 = vld [vmem:[#allocation11 + $0x8] sm:$0xff]
    %v420 = vld [vmem:[#allocation11 + $0x10] sm:$0xff]
    %v421 = vld [vmem:[#allocation11 + $0x18] sm:$0xff]
    %v422 = vld [vmem:[#allocation11 + $0x20] sm:$0xff]
    %v423 = vld [vmem:[#allocation11 + $0x28] sm:$0xff]
    %v424 = vld [vmem:[#allocation11 + $0x30] sm:$0xff]
    %v425 = vld [vmem:[#allocation11 + $0x38] sm:$0xff]
    %v426 = vld [vmem:[#allocation11 + $0x40] sm:$0xff]
    %v427 = vld [vmem:[#allocation11 + $0x48] sm:$0xff]
    %v428 = vld [vmem:[#allocation11 + $0x50] sm:$0xff]
    %v429 = vld [vmem:[#allocation11 + $0x58] sm:$0xff]
    %v430 = vld [vmem:[#allocation11 + $0x60] sm:$0xff]
    %v431 = vld [vmem:[#allocation11 + $0x68] sm:$0xff]
    %v432 = vld [vmem:[#allocation11 + $0x70] sm:$0xff]
    %v433 = vld [vmem:[#allocation11 + $0x78] sm:$0xff]
    %v434 = vld [vmem:[%s7] sm:$0x1]
    %v436 = vlaneseq
    %v437 = vshrl.u32 %v436, 7
    %v438 = vsub.s32 0, %v437
    %v439 = vrot.slane %v434, %v438
    %441 = vmatprep.subr.mxu0 0.0
    %442 = vmatpush1.msra.mxu0 %v433
    %443 = vmatprep.subr.mxu0 0.0
    %444 = vmatpush1.msra.mxu0 %v432
    %445 = vmatprep.subr.mxu0 0.0
    %446 = vmatpush1.msra.mxu0 %v431
    %447 = vmatprep.subr.mxu0 0.0
    %448 = vmatpush1.msra.mxu0 %v430
    %449 = vmatprep.subr.mxu0 0.0
    %450 = vmatpush1.msra.mxu0 %v429
    %451 = vmatprep.subr.mxu0 0.0
    %452 = vmatpush1.msra.mxu0 %v428
    %453 = vmatprep.subr.mxu0 0.0
    %454 = vmatpush1.msra.mxu0 %v427
    %455 = vmatprep.subr.mxu0 0.0
    %456 = vmatpush1.msra.mxu0 %v426
    %457 = vmatprep.subr.mxu0 0.0
    %458 = vmatpush1.msra.mxu0 %v425
    %459 = vmatprep.subr.mxu0 0.0
    %460 = vmatpush1.msra.mxu0 %v424
    %461 = vmatprep.subr.mxu0 0.0
    %462 = vmatpush1.msra.mxu0 %v423
    %463 = vmatprep.subr.mxu0 0.0
    %464 = vmatpush1.msra.mxu0 %v422
    %465 = vmatprep.subr.mxu0 0.0
    %466 = vmatpush1.msra.mxu0 %v421
    %467 = vmatprep.subr.mxu0 0.0
    %468 = vmatpush1.msra.mxu0 %v420
    %469 = vmatprep.subr.mxu0 0.0
    %470 = vmatpush1.msra.mxu0 %v419
    %471 = vmatprep.subr.mxu0 0.0
    %472 = vmatpush1.msra.mxu0 %v418
    %473 = vmatprep.subr.mxu0 0.0
    %474 = vmatpush2.msra.mxu0 0.0
    %475 = vmatprep.subr.mxu0 0.0
    %476 = vmatpush2.msra.mxu0 0.0
    %477 = vmatprep.subr.mxu0 0.0
    %478 = vmatpush2.msra.mxu0 0.0
    %479 = vmatprep.subr.mxu0 0.0
    %480 = vmatpush2.msra.mxu0 0.0
    %481 = vmatprep.subr.mxu0 0.0
    %482 = vmatpush2.msra.mxu0 0.0
    %483 = vmatprep.subr.mxu0 0.0
    %484 = vmatpush2.msra.mxu0 0.0
    %485 = vmatprep.subr.mxu0 0.0
    %486 = vmatpush2.msra.mxu0 0.0
    %487 = vmatprep.subr.mxu0 0.0
    %488 = vmatpush2.msra.mxu0 0.0
    %489 = vmatprep.subr.mxu0 0.0
    %490 = vmatpush2.msra.mxu0 0.0
    %491 = vmatprep.subr.mxu0 0.0
    %492 = vmatpush2.msra.mxu0 0.0
    %493 = vmatprep.subr.mxu0 0.0
    %494 = vmatpush2.msra.mxu0 0.0
    %495 = vmatprep.subr.mxu0 0.0
    %496 = vmatpush2.msra.mxu0 0.0
    %497 = vmatprep.subr.mxu0 0.0
    %498 = vmatpush2.msra.mxu0 0.0
    %499 = vmatprep.subr.mxu0 0.0
    %500 = vmatpush2.msra.mxu0 0.0
    %501 = vmatprep.subr.mxu0 0.0
    %502 = vmatpush2.msra.mxu0 0.0
    %503 = vmatprep.subr.mxu0 0.0
    %504 = vmatpush2.msra.mxu0 0.0
    %505 = vmatprep.mubr.f32.mxu0 0.0
    %506 = vmatmul.mubr.f32.gmra.mxu0 %v417
    %v507 = vpop.f32.mrf.mxu0
    %v508 = vadd.f32 %v439, %v507
    %v509 = vpop.f32.mrf.mxu0
    %510 = vdwg.mxu0
    %v511 = vadd.f32 %v323, %v508
    %v512 = vld [vmem:[%s10] sm:$0x1]
    %v513 = vld [vmem:[%s11] sm:$0x1]
    %514 = vadd.xlane.f32.xlu0 %v511
    %v515 = vpop.xlane.xlu0 %514
    %v516 = vmul.f32 %v515, 0.03125
    %v517 = vsub.f32 %v511, %v516
    %v518 = vsel %vm300, %v517, 0.0
    %v519 = vmul.f32 %v518, %v518
    %520 = vadd.xlane.f32.xlu0 %v519
    %v521 = vpop.xlane.xlu0 %520
    %v522 = vmul.f32 %v521, 0.03125
    %v523 = vadd.f32 %v522, 1e-05
    %v524 = vrsqrt.pop %v523
    %v525 = vmul.f32 %v518, %v524
    %v527 = vlaneseq
    %v528 = vshrl.u32 %v527, 7
    %v529 = vsub.s32 0, %v528
    %v530 = vrot.slane %v512, %v529
    %v532 = vmul.f32 %v525, %v530
    %v534 = vlaneseq
    %v535 = vshrl.u32 %v534, 7
    %v536 = vsub.s32 0, %v535
    %v537 = vrot.slane %v513, %v536
    %v539 = vadd.f32 %v532, %v537
    %540 = vst [vmem:[#allocation13] sm:$0xff] %v539
    // Predicated region
    $region74: #{tpu_custom_call.1} parent=1 // pred_check
      _
    $region75: #{tpu_custom_call.1} parent=1 // pred_check_branch
      %542 = sbr.rel (0) target = $region77
    $region76: #{tpu_custom_call.1} parent=1 // pred_region
      %s544 = ssub.s32 128, 128
      %545 = vsyncadd [#allocation4], %s544
      %s547 = sshll.u32 [#allocation13], 4
      %s548 = int_to_ptr.vmem [resolvable:$true] %s547
      %550 = dma.vmem_to_hbm [thread:$0]  %s548, 128, %s12, [#allocation4]
    $region77: #{tpu_custom_call.1} parent=1 // pred_fallthru
      _
    // Predicated region
    $region78: #{tpu_custom_call.1} parent=1 // pred_check
      _
    $region79: #{tpu_custom_call.1} parent=1 // pred_check_branch
      %552 = sbr.rel (0) target = $region81
    $region80: #{tpu_custom_call.1} parent=1 // pred_region
      %553 = dma.done [#allocation4], 128
    $region81: #{tpu_custom_call.1} parent=1 // pred_fallthru
      _
    %554 = vsyncpa [#allocation3], 1
    %555 = vsyncpa [#allocation6], 1
    %556 = vsyncpa [#allocation9], 1
    %557 = vsyncpa [#allocation12], 1
    %558 = vsyncpa [#allocation4], 1

</llo_original>
